<compile_context>
chip_gen: v6e
topology: v6e:2x2x1
jax: 0.10.0
libtpu: 0.0.40
codegen_flags: <defaults>
</compile_context>

<pallas_src>
import math

import jax
import jax.numpy as jnp
from jax.experimental import pallas as pl
from jax.experimental.pallas import tpu as pltpu


# ----------------------------------------------------------------------------- kernel
def _gru_memory_updater_kernel(
    dt_ref, x_ref, mem_ref,                       # per-node tiles
    time_w_ref, time_b_ref,                       # TimeEncode params (resident)
    wx4_ref, wt4_ref, bx4_ref,                    # fused x-path weights (resident)
    wh3_ref, bh3_ref,                             # h-path weights (resident)
    mem_out_ref, h_out_ref,
):
    H = mem_ref.shape[-1]

    # --- TimeEncode: cos(dt * w + b) ------------------------------------------
    time_feat = jnp.cos(dt_ref[...] * time_w_ref[...] + time_b_ref[...])   # (T, dim_time)

    # --- Fused x-path: [gate_r | gate_z | gate_n | proj] -> (T, 4H) ------------
    g4 = (
        jnp.dot(x_ref[...], wx4_ref[...], preferred_element_type=jnp.float32)
        + jnp.dot(time_feat, wt4_ref[...], preferred_element_type=jnp.float32)
        + bx4_ref[...]
    )

    # --- h-path: mem @ Whh + [0 | 0 | bhh_n] -> (T, 3H) ------------------------
    mem = mem_ref[...]
    gh = (
        jnp.dot(mem, wh3_ref[...], preferred_element_type=jnp.float32)
        + bh3_ref[...]
    )

    # --- GRU gate math ----------------------------------------------------------
    r = jax.nn.sigmoid(g4[:, 0:H] + gh[:, 0:H])
    z = jax.nn.sigmoid(g4[:, H:2 * H] + gh[:, H:2 * H])
    n = jnp.tanh(g4[:, 2 * H:3 * H] + r * gh[:, 2 * H:3 * H])
    h_new = (1.0 - z) * n + z * mem                                       # (T, H)

    mem_out_ref[...] = h_new
    # --- node_feat_proj residual (proj columns of the fused matmul) ------------
    h_out_ref[...] = h_new + g4[:, 3 * H:4 * H]


# ----------------------------------------------------------------------------- wrapper
def _round_up(x, m):
    return (x + m - 1) // m * m


def gru_memory_updater_forward(params, srcdata, num_dst_nodes, *, tile_n=512):
    """Returns (last_updated dict, updated_memory, new_h)."""
    ts = srcdata["ts"].astype(jnp.float32)
    mem_ts = srcdata["mem_ts"].astype(jnp.float32)
    dt = (ts - mem_ts).reshape(-1, 1)                                     # (N, 1)
    mem_input = srcdata["mem_input"].astype(jnp.float32)
    mem = srcdata["mem"].astype(jnp.float32)
    h_feat = srcdata["h"].astype(jnp.float32)

    N, H = mem.shape
    x_all = jnp.concatenate([mem_input, h_feat], axis=1)                  # (N, Kx)
    Kx = x_all.shape[1]
    dim_time = params["time_w"].shape[1]

    # Tile the node axis. TILE_N kept well under the v7x scoped-VMEM budget,
    # multiple of 8 (f32 sublane tile); pad N up to a multiple of the tile.
    tile = min(tile_n, _round_up(N, 8))
    n_pad = _round_up(N, tile)
    grid = (pl.cdiv(n_pad, tile),)

    def pad_rows(a):
        return a if n_pad == N else jnp.pad(a, ((0, n_pad - N), (0, 0)))

    dt_p, x_p, mem_p = pad_rows(dt), pad_rows(x_all), pad_rows(mem)

    def row_spec(feat):
        return pl.BlockSpec((tile, feat), lambda i: (i, 0))

    def const_spec(shape):
        return pl.BlockSpec(shape, lambda i: (0, 0))

    in_specs = [
        row_spec(1),                              # dt
        row_spec(Kx),                             # [mem_input | node_feat]
        row_spec(H),                              # mem
        const_spec(params["time_w"].shape),
        const_spec(params["time_b"].shape),
        const_spec(params["wx4"].shape),
        const_spec(params["wt4"].shape),
        const_spec(params["bx4"].shape),
        const_spec(params["whh3"].shape),
        const_spec(params["bh3"].shape),
    ]
    out_shapes = (
        jax.ShapeDtypeStruct((n_pad, H), jnp.float32),                    # updated memory
        jax.ShapeDtypeStruct((n_pad, H), jnp.float32),                    # new node embeddings 'h'
    )
    out_specs = [row_spec(H), row_spec(H)]

    # Advisory cost estimate (matmul flops, transcendental count, HBM traffic).
    flops = 2 * n_pad * (Kx * 4 * H + dim_time * 4 * H + H * 3 * H)
    transcendentals = n_pad * (dim_time + 3 * H)
    bytes_accessed = 4 * (
        n_pad * (1 + Kx + H)                      # per-node inputs
        + (Kx + dim_time) * 4 * H + 4 * H         # fused x-path weights/bias
        + H * 3 * H + 3 * H + 2 * dim_time        # h-path weights/bias + time enc
        + 2 * n_pad * H                           # outputs
    )

    updated_memory, new_h = pl.pallas_call(
        _gru_memory_updater_kernel,
        out_shape=out_shapes,
        grid=grid,
        in_specs=in_specs,
        out_specs=out_specs,
        compiler_params=pltpu.CompilerParams(
            dimension_semantics=("parallel",)),
        cost_estimate=pl.CostEstimate(
            flops=int(flops),
            transcendentals=int(transcendentals),
            bytes_accessed=int(bytes_accessed)),
    )(dt_p, x_p, mem_p,
      params["time_w"], params["time_b"],
      params["wx4"], params["wt4"], params["bx4"],
      params["whh3"], params["bh3"])

    updated_memory = updated_memory[:N]
    new_h = new_h[:N]

    last_updated = {
        "last_updated_nid": srcdata["ID"][:num_dst_nodes],
        "last_updated_memory": updated_memory[:num_dst_nodes],
        "last_updated_ts": srcdata["ts"][:num_dst_nodes],
    }
    return last_updated, updated_memory, new_h


# ----------------------------------------------------------------------------- params
def make_params(key, dim_node, dim_edge, dim_time, dim_memory):
    """Deterministic synthetic parameters matching the PyTorch module shapes,
    packed into the fused kernel layout."""
    dim_message = 2 * dim_memory + dim_edge
    dim_in = dim_message + dim_time
    H = dim_memory

    k = jax.random.split(key, 6)
    bound = 1.0 / math.sqrt(H)

    # GRUCell: weight_ih (3H, dim_in), weight_hh (3H, H), biases (3H,)
    weight_ih = jax.random.uniform(k[0], (3 * H, dim_in), jnp.float32, -bound, bound)
    weight_hh = jax.random.uniform(k[1], (3 * H, H), jnp.float32, -bound, bound)
    bias_ih = jax.random.uniform(k[2], (3 * H,), jnp.float32, -bound, bound)
    bias_hh = jax.random.uniform(k[3], (3 * H,), jnp.float32, -bound, bound)

    # TimeEncode: w = 1 / 10**linspace(0, 9, dim_time), b = 0
    time_w = (1.0 / (10.0 ** jnp.linspace(0.0, 9.0, dim_time))).astype(jnp.float32)
    time_b = jnp.zeros((dim_time,), jnp.float32)

    # node_feat_proj: Linear(dim_node, dim_memory)
    pbound = 1.0 / math.sqrt(dim_node)
    proj_w = jax.random.uniform(k[4], (H, dim_node), jnp.float32, -pbound, pbound)
    proj_b = jax.random.uniform(k[5], (H,), jnp.float32, -pbound, pbound)

    wih_T = weight_ih.T                       # (dim_in, 3H), gate order [r | z | n]
    whh_T = weight_hh.T                       # (H, 3H)
    wih_msg_T = wih_T[:dim_message, :]        # rows for mem_input
    wih_time_T = wih_T[dim_message:, :]       # rows for time_feat

    # Fused x-path weight: rows = [mem_input ; node_feat], cols = [r | z | n | proj]
    wx4 = jnp.zeros((dim_message + dim_node, 4 * H), jnp.float32)
    wx4 = wx4.at[:dim_message, :3 * H].set(wih_msg_T)
    wx4 = wx4.at[dim_message:, 3 * H:].set(proj_w.T)

    # Time-feature weight padded with zero proj columns.
    wt4 = jnp.zeros((dim_time, 4 * H), jnp.float32)
    wt4 = wt4.at[:, :3 * H].set(wih_time_T)

    # Bias: fold bhh into the r/z columns (safe); keep bhh_n on the h-path
    # because PyTorch GRUCell applies it inside r*( h @ Whn + bhn ).
    bx4 = jnp.concatenate([
        bias_ih[0:H] + bias_hh[0:H],
        bias_ih[H:2 * H] + bias_hh[H:2 * H],
        bias_ih[2 * H:3 * H],
        proj_b,
    ]).reshape(1, 4 * H)
    bh3 = jnp.concatenate([
        jnp.zeros((2 * H,), jnp.float32),
        bias_hh[2 * H:3 * H],
    ]).reshape(1, 3 * H)

    return {
        # packed kernel params
        "time_w": time_w.reshape(1, dim_time),
        "time_b": time_b.reshape(1, dim_time),
        "wx4": wx4,
        "wt4": wt4,
        "bx4": bx4,
        "whh3": whh_T,
        "bh3": bh3,
        # raw params kept for the pure-JAX reference
        "wih_T": wih_T,
        "whh_T": whh_T,
        "bih": bias_ih.reshape(1, 3 * H),
        "bhh": bias_hh.reshape(1, 3 * H),
        "proj_w_T": proj_w.T,
        "proj_b_row": proj_b.reshape(1, H),
    }


# ----------------------------------------------------------------------------- reference
def _reference_forward(params, srcdata):
    """Pure-JAX reference (mirrors the PyTorch module) for correctness checking."""
    dt = (srcdata["ts"] - srcdata["mem_ts"]).reshape(-1, 1)
    time_feat = jnp.cos(dt * params["time_w"] + params["time_b"])
    x = jnp.concatenate([srcdata["mem_input"], time_feat], axis=1)
    h = srcdata["mem"]
    gx = x @ params["wih_T"] + params["bih"]
    gh = h @ params["whh_T"] + params["bhh"]
    H = h.shape[-1]
    r = jax.nn.sigmoid(gx[:, :H] + gh[:, :H])
    z = jax.nn.sigmoid(gx[:, H:2 * H] + gh[:, H:2 * H])
    n = jnp.tanh(gx[:, 2 * H:] + r * gh[:, 2 * H:])
    h_new = (1 - z) * n + z * h
    new_h = h_new + srcdata["h"] @ params["proj_w_T"] + params["proj_b_row"]
    return h_new, new_h


if __name__ == "__main__":
    # Small, module-consistent shapes.
    dim_node, dim_edge, dim_time, dim_memory = 24, 16, 32, 32
    dim_message = 2 * dim_memory + dim_edge
    N, num_dst = 16, 8

    key = jax.random.PRNGKey(0)
    kp, k1, k2, k3, k4, k5 = jax.random.split(key, 6)

    params = make_params(kp, dim_node, dim_edge, dim_time, dim_memory)

    srcdata = {
        "ID": jnp.arange(N, dtype=jnp.int32),
        "ts": jax.random.uniform(k1, (N,), jnp.float32, 0.0, 100.0),
        "mem_ts": jax.random.uniform(k2, (N,), jnp.float32, 0.0, 50.0),
        "mem_input": jax.random.normal(k3, (N, dim_message), jnp.float32),
        "mem": jax.random.normal(k4, (N, dim_memory), jnp.float32),
        "h": jax.random.normal(k5, (N, dim_node), jnp.float32),
    }

    last_updated, updated_memory, new_h = gru_memory_updater_forward(
        params, srcdata, num_dst)
    jax.block_until_ready((last_updated, updated_memory, new_h))

    # Sanity check against pure-JAX reference.
    ref_mem, ref_h = _reference_forward(params, srcdata)
    assert jnp.allclose(updated_memory, ref_mem, atol=1e-4, rtol=1e-4)
    assert jnp.allclose(new_h, ref_h, atol=1e-4, rtol=1e-4)
    assert last_updated["last_updated_memory"].shape == (num_dst, dim_memory)
    assert last_updated["last_updated_nid"].shape == (num_dst,)
    assert last_updated["last_updated_ts"].shape == (num_dst,)

    # TODO(synk): DGLBlock graph bookkeeping (num_dst_nodes, srcdata mutation) has no
    # Pallas equivalent and remains plain-JAX glue around the kernel.

    print("KERNEL_OK")
</pallas_src>

<mosaic_0001>
module attributes {stable_mosaic.version = 11 : i64} {
  func.func @_gru_memory_updater_kernel(%arg0: i32, %arg1: memref<16x1xf32, #tpu.memory_space<vmem>>, %arg2: memref<16x104xf32, #tpu.memory_space<vmem>>, %arg3: memref<16x32xf32, #tpu.memory_space<vmem>>, %arg4: memref<1x32xf32, #tpu.memory_space<vmem>>, %arg5: memref<1x32xf32, #tpu.memory_space<vmem>>, %arg6: memref<104x128xf32, #tpu.memory_space<vmem>>, %arg7: memref<32x128xf32, #tpu.memory_space<vmem>>, %arg8: memref<1x128xf32, #tpu.memory_space<vmem>>, %arg9: memref<32x96xf32, #tpu.memory_space<vmem>>, %arg10: memref<1x96xf32, #tpu.memory_space<vmem>>, %arg11: memref<16x32xf32, #tpu.memory_space<vmem>>, %arg12: memref<16x32xf32, #tpu.memory_space<vmem>>) attributes {dimension_semantics = [#tpu.dimension_semantics<parallel>], iteration_bounds = array<i64: 1>, scalar_prefetch = 0 : i64, scratch_operands = 0 : i64, tpu.core_type = #tpu.core_type<tc>, window_params = [{transform_indices = @transform_0, window_bounds = array<i64: 16, 1>}, {transform_indices = @transform_1, window_bounds = array<i64: 16, 104>}, {transform_indices = @transform_2, window_bounds = array<i64: 16, 32>}, {pipeline_mode = #tpu.pipeline_mode<synchronous>, transform_indices = @transform_3, window_bounds = array<i64: 1, 32>}, {pipeline_mode = #tpu.pipeline_mode<synchronous>, transform_indices = @transform_4, window_bounds = array<i64: 1, 32>}, {pipeline_mode = #tpu.pipeline_mode<synchronous>, transform_indices = @transform_5, window_bounds = array<i64: 104, 128>}, {pipeline_mode = #tpu.pipeline_mode<synchronous>, transform_indices = @transform_6, window_bounds = array<i64: 32, 128>}, {pipeline_mode = #tpu.pipeline_mode<synchronous>, transform_indices = @transform_7, window_bounds = array<i64: 1, 128>}, {pipeline_mode = #tpu.pipeline_mode<synchronous>, transform_indices = @transform_8, window_bounds = array<i64: 32, 96>}, {pipeline_mode = #tpu.pipeline_mode<synchronous>, transform_indices = @transform_9, window_bounds = array<i64: 1, 96>}, {transform_indices = @transform_10, window_bounds = array<i64: 16, 32>}, {transform_indices = @transform_11, window_bounds = array<i64: 16, 32>}]} {
    %c0 = arith.constant 0 : index
    %c0_0 = arith.constant 0 : index
    %0 = vector.load %arg1[%c0, %c0_0] : memref<16x1xf32, #tpu.memory_space<vmem>>, vector<16x1xf32>
    %c0_1 = arith.constant 0 : index
    %c0_2 = arith.constant 0 : index
    %1 = vector.load %arg4[%c0_1, %c0_2] : memref<1x32xf32, #tpu.memory_space<vmem>>, vector<1x32xf32>
    %2 = vector.broadcast %0 : vector<16x1xf32> to vector<16x32xf32>
    %3 = vector.broadcast %1 : vector<1x32xf32> to vector<16x32xf32>
    %4 = arith.mulf %2, %3 : vector<16x32xf32>
    %c0_3 = arith.constant 0 : index
    %c0_4 = arith.constant 0 : index
    %5 = vector.load %arg5[%c0_3, %c0_4] : memref<1x32xf32, #tpu.memory_space<vmem>>, vector<1x32xf32>
    %6 = vector.broadcast %5 : vector<1x32xf32> to vector<16x32xf32>
    %7 = arith.addf %4, %6 : vector<16x32xf32>
    %8 = math.cos %7 : vector<16x32xf32>
    %c0_5 = arith.constant 0 : index
    %c0_6 = arith.constant 0 : index
    %9 = vector.load %arg2[%c0_5, %c0_6] : memref<16x104xf32, #tpu.memory_space<vmem>>, vector<16x104xf32>
    %c0_7 = arith.constant 0 : index
    %c0_8 = arith.constant 0 : index
    %10 = vector.load %arg6[%c0_7, %c0_8] : memref<104x128xf32, #tpu.memory_space<vmem>>, vector<104x128xf32>
    %cst = arith.constant dense<0.000000e+00> : vector<16x128xf32>
    %11 = tpu.matmul %9, %10, %cst {dimension_numbers = #tpu.dot_dimension_numbers<[1], [0], [0], [1], [0, 0, 1, 1], [], []>} : vector<16x104xf32>, vector<104x128xf32>, vector<16x128xf32> -> vector<16x128xf32>
    %c0_9 = arith.constant 0 : index
    %c0_10 = arith.constant 0 : index
    %12 = vector.load %arg7[%c0_9, %c0_10] : memref<32x128xf32, #tpu.memory_space<vmem>>, vector<32x128xf32>
    %cst_11 = arith.constant dense<0.000000e+00> : vector<16x128xf32>
    %13 = tpu.matmul %8, %12, %cst_11 {dimension_numbers = #tpu.dot_dimension_numbers<[1], [0], [0], [1], [0, 0, 1, 1], [], []>} : vector<16x32xf32>, vector<32x128xf32>, vector<16x128xf32> -> vector<16x128xf32>
    %14 = arith.addf %11, %13 : vector<16x128xf32>
    %c0_12 = arith.constant 0 : index
    %c0_13 = arith.constant 0 : index
    %15 = vector.load %arg8[%c0_12, %c0_13] : memref<1x128xf32, #tpu.memory_space<vmem>>, vector<1x128xf32>
    %16 = vector.broadcast %15 : vector<1x128xf32> to vector<16x128xf32>
    %17 = arith.addf %14, %16 : vector<16x128xf32>
    %c0_14 = arith.constant 0 : index
    %c0_15 = arith.constant 0 : index
    %18 = vector.load %arg3[%c0_14, %c0_15] : memref<16x32xf32, #tpu.memory_space<vmem>>, vector<16x32xf32>
    %c0_16 = arith.constant 0 : index
    %c0_17 = arith.constant 0 : index
    %19 = vector.load %arg9[%c0_16, %c0_17] : memref<32x96xf32, #tpu.memory_space<vmem>>, vector<32x96xf32>
    %cst_18 = arith.constant dense<0.000000e+00> : vector<16x96xf32>
    %20 = tpu.matmul %18, %19, %cst_18 {dimension_numbers = #tpu.dot_dimension_numbers<[1], [0], [0], [1], [0, 0, 1, 1], [], []>} : vector<16x32xf32>, vector<32x96xf32>, vector<16x96xf32> -> vector<16x96xf32>
    %c0_19 = arith.constant 0 : index
    %c0_20 = arith.constant 0 : index
    %21 = vector.load %arg10[%c0_19, %c0_20] : memref<1x96xf32, #tpu.memory_space<vmem>>, vector<1x96xf32>
    %22 = vector.broadcast %21 : vector<1x96xf32> to vector<16x96xf32>
    %23 = arith.addf %20, %22 : vector<16x96xf32>
    %24 = vector.extract_strided_slice %17 {offsets = [0, 0], sizes = [16, 32], strides = [1, 1]} : vector<16x128xf32> to vector<16x32xf32>
    %25 = vector.extract_strided_slice %23 {offsets = [0, 0], sizes = [16, 32], strides = [1, 1]} : vector<16x96xf32> to vector<16x32xf32>
    %26 = arith.addf %24, %25 : vector<16x32xf32>
    %27 = arith.negf %26 : vector<16x32xf32>
    %28 = math.exp %27 : vector<16x32xf32>
    %cst_21 = arith.constant 1.000000e+00 : f32
    %29 = vector.broadcast %cst_21 : f32 to vector<16x32xf32>
    %30 = arith.addf %29, %28 : vector<16x32xf32>
    %31 = arith.divf %29, %30 : vector<16x32xf32>
    %32 = vector.extract_strided_slice %17 {offsets = [0, 32], sizes = [16, 32], strides = [1, 1]} : vector<16x128xf32> to vector<16x32xf32>
    %33 = vector.extract_strided_slice %23 {offsets = [0, 32], sizes = [16, 32], strides = [1, 1]} : vector<16x96xf32> to vector<16x32xf32>
    %34 = arith.addf %32, %33 : vector<16x32xf32>
    %35 = arith.negf %34 : vector<16x32xf32>
    %36 = math.exp %35 : vector<16x32xf32>
    %cst_22 = arith.constant 1.000000e+00 : f32
    %37 = vector.broadcast %cst_22 : f32 to vector<16x32xf32>
    %38 = arith.addf %37, %36 : vector<16x32xf32>
    %39 = arith.divf %37, %38 : vector<16x32xf32>
    %40 = vector.extract_strided_slice %17 {offsets = [0, 64], sizes = [16, 32], strides = [1, 1]} : vector<16x128xf32> to vector<16x32xf32>
    %41 = vector.extract_strided_slice %23 {offsets = [0, 64], sizes = [16, 32], strides = [1, 1]} : vector<16x96xf32> to vector<16x32xf32>
    %42 = arith.mulf %31, %41 : vector<16x32xf32>
    %43 = arith.addf %40, %42 : vector<16x32xf32>
    %44 = math.tanh %43 : vector<16x32xf32>
    %cst_23 = arith.constant 1.000000e+00 : f32
    %45 = vector.broadcast %cst_23 : f32 to vector<16x32xf32>
    %46 = arith.subf %45, %39 : vector<16x32xf32>
    %47 = arith.mulf %46, %44 : vector<16x32xf32>
    %48 = arith.mulf %39, %18 : vector<16x32xf32>
    %49 = arith.addf %47, %48 : vector<16x32xf32>
    %c0_24 = arith.constant 0 : index
    %c0_25 = arith.constant 0 : index
    %50 = vector.load %arg11[%c0_24, %c0_25] : memref<16x32xf32, #tpu.memory_space<vmem>>, vector<16x32xf32>
    tpu.vector_store %arg11[%c0_24, %c0_25], %49 {strides = array<i32>} : memref<16x32xf32, #tpu.memory_space<vmem>>, vector<16x32xf32>,
    %51 = vector.extract_strided_slice %17 {offsets = [0, 96], sizes = [16, 32], strides = [1, 1]} : vector<16x128xf32> to vector<16x32xf32>
    %52 = arith.addf %49, %51 : vector<16x32xf32>
    %c0_26 = arith.constant 0 : index
    %c0_27 = arith.constant 0 : index
    %53 = vector.load %arg12[%c0_26, %c0_27] : memref<16x32xf32, #tpu.memory_space<vmem>>, vector<16x32xf32>
    tpu.vector_store %arg12[%c0_26, %c0_27], %52 {strides = array<i32>} : memref<16x32xf32, #tpu.memory_space<vmem>>, vector<16x32xf32>,
    return
  }
  func.func @transform_0(%arg0: i32) -> (i32, i32) {
    %c0_i32 = arith.constant 0 : i32
    %c0_i32_0 = arith.constant 0 : i32
    return %arg0, %c0_i32 : i32, i32
  }
  func.func @transform_1(%arg0: i32) -> (i32, i32) {
    %c0_i32 = arith.constant 0 : i32
    %c0_i32_0 = arith.constant 0 : i32
    return %arg0, %c0_i32 : i32, i32
  }
  func.func @transform_2(%arg0: i32) -> (i32, i32) {
    %c0_i32 = arith.constant 0 : i32
    %c0_i32_0 = arith.constant 0 : i32
    return %arg0, %c0_i32 : i32, i32
  }
  func.func @transform_3(%arg0: i32) -> (i32, i32) {
    %c0_i32 = arith.constant 0 : i32
    %c0_i32_0 = arith.constant 0 : i32
    %c0_i32_1 = arith.constant 0 : i32
    return %c0_i32, %c0_i32_0 : i32, i32
  }
  func.func @transform_4(%arg0: i32) -> (i32, i32) {
    %c0_i32 = arith.constant 0 : i32
    %c0_i32_0 = arith.constant 0 : i32
    %c0_i32_1 = arith.constant 0 : i32
    return %c0_i32, %c0_i32_0 : i32, i32
  }
  func.func @transform_5(%arg0: i32) -> (i32, i32) {
    %c0_i32 = arith.constant 0 : i32
    %c0_i32_0 = arith.constant 0 : i32
    %c0_i32_1 = arith.constant 0 : i32
    return %c0_i32, %c0_i32_0 : i32, i32
  }
  func.func @transform_6(%arg0: i32) -> (i32, i32) {
    %c0_i32 = arith.constant 0 : i32
    %c0_i32_0 = arith.constant 0 : i32
    %c0_i32_1 = arith.constant 0 : i32
    return %c0_i32, %c0_i32_0 : i32, i32
  }
  func.func @transform_7(%arg0: i32) -> (i32, i32) {
    %c0_i32 = arith.constant 0 : i32
    %c0_i32_0 = arith.constant 0 : i32
    %c0_i32_1 = arith.constant 0 : i32
    return %c0_i32, %c0_i32_0 : i32, i32
  }
  func.func @transform_8(%arg0: i32) -> (i32, i32) {
    %c0_i32 = arith.constant 0 : i32
    %c0_i32_0 = arith.constant 0 : i32
    %c0_i32_1 = arith.constant 0 : i32
    return %c0_i32, %c0_i32_0 : i32, i32
  }
  func.func @transform_9(%arg0: i32) -> (i32, i32) {
    %c0_i32 = arith.constant 0 : i32
    %c0_i32_0 = arith.constant 0 : i32
    %c0_i32_1 = arith.constant 0 : i32
    return %c0_i32, %c0_i32_0 : i32, i32
  }
  func.func @transform_10(%arg0: i32) -> (i32, i32) {
    %c0_i32 = arith.constant 0 : i32
    %c0_i32_0 = arith.constant 0 : i32
    return %arg0, %c0_i32 : i32, i32
  }
  func.func @transform_11(%arg0: i32) -> (i32, i32) {
    %c0_i32 = arith.constant 0 : i32
    %c0_i32_0 = arith.constant 0 : i32
    return %arg0, %c0_i32 : i32, i32
  }
}

</mosaic_0001>

<llo_original>
// kernel: tpu_custom_call.1
$region0: #{tpu_custom_call.1}
  #allocation0 [shape = 'u32[]', space=smem, size = 0x4, offset = 0x4, fixed_abs, tag = 'smem constant byte address 0x4 - core index']
  #allocation1 [shape = 'u32[144,128]{1,0:T(1,128)}', space=vmem, size = 0x12000, scoped, tag = 'internal scratch']
  %s0 = inlined_call_operand.vmem [shape: f32[16,1], index: 0, kind: input, shape index: {}]
  %s1 = inlined_call_operand.vmem [shape: f32[16,104], index: 1, kind: input, shape index: {}]
  %s2 = inlined_call_operand.hbm [shape: f32[16,32], index: 2, kind: input, shape index: {}]
  %s3 = inlined_call_operand.vmem [shape: f32[1,32], index: 3, kind: input, shape index: {}]
  %s4 = inlined_call_operand.vmem [shape: f32[1,32], index: 4, kind: input, shape index: {}]
  %s5 = inlined_call_operand.hbm [shape: f32[104,128], index: 5, kind: input, shape index: {}]
  %s6 = inlined_call_operand.hbm [shape: f32[32,128], index: 6, kind: input, shape index: {}]
  %s7 = inlined_call_operand.vmem [shape: f32[1,128], index: 7, kind: input, shape index: {}]
  %s8 = inlined_call_operand.hbm [shape: f32[32,96], index: 8, kind: input, shape index: {}]
  %s9 = inlined_call_operand.vmem [shape: f32[1,96], index: 9, kind: input, shape index: {}]
  %s10 = inlined_call_operand.hbm [shape: f32[16,32], index: 10, kind: output, shape index: {0}]
  %s11 = inlined_call_operand.hbm [shape: f32[16,32], index: 11, kind: output, shape index: {1}]
  %12 = xla_tuple %s10, %s11
  %s13 = sld [smem:[#allocation0]]
  $region74: #{tpu_custom_call.1} parent=0
    _
  %s15 = ssub.s32 1, %s13
  %s16 = scalar_select 0, %s15, %s13
  $region1: #{tpu_custom_call.1} parent=0
    #allocation2 [shape = 'u8[8192]{0}', space=vmem, size = 0x2000, scoped, tag = 'input window, operand 2, single buffered']
    #allocation3 [shape = 's32[1]{0}', space=sflag, size = 0x4, scoped, tag = 'scoped memory for tpu_custom_call.1']
    #allocation4 [shape = 's32[1]{0}', space=sflag, size = 0x4, scoped, tag = 'scoped memory for tpu_custom_call.1']
    #allocation5 [shape = 'u8[53248]{0}', space=vmem, size = 0xd000, scoped, tag = 'input window, operand 5, single buffered']
    #allocation6 [shape = 's32[1]{0}', space=sflag, size = 0x4, scoped, tag = 'scoped memory for tpu_custom_call.1']
    #allocation7 [shape = 'u8[16384]{0}', space=vmem, size = 0x4000, scoped, tag = 'input window, operand 6, single buffered']
    #allocation8 [shape = 'u8[16384]{0}', space=vmem, size = 0x4000, scoped, tag = 'input window, operand 8, single buffered']
    #allocation9 [shape = 's32[1]{0}', space=sflag, size = 0x4, scoped, tag = 'scoped memory for tpu_custom_call.1']
    #allocation10 [shape = 'u8[8192]{0}', space=vmem, size = 0x2000, scoped, tag = 'output window, operand 0, single buffered']
    #allocation11 [shape = 'u8[8192]{0}', space=vmem, size = 0x2000, scoped, tag = 'output window, operand 1, single buffered']
    #allocation12 [shape = 's32[1]{0}', space=sflag, size = 0x4, scoped, tag = 'scoped memory for tpu_custom_call.1']
    %17 = vsyncpa [#allocation3], 0
    %18 = vsyncpa [#allocation6], 0
    %19 = vsyncpa [#allocation9], 0
    %20 = vsyncpa [#allocation4], 0
    %21 = vsyncpa [#allocation12], 0
    // Predicated region
    $region2: #{tpu_custom_call.1} parent=1 // pred_check
      _
    $region3: #{tpu_custom_call.1} parent=1 // pred_check_branch
      %23 = sbr.rel (0) target = $region5
    $region4: #{tpu_custom_call.1} parent=1 // pred_region
      _
    $region5: #{tpu_custom_call.1} parent=1 // pred_fallthru
      _
    // Predicated region
    $region6: #{tpu_custom_call.1} parent=1 // pred_check
      _
    $region7: #{tpu_custom_call.1} parent=1 // pred_check_branch
      %25 = sbr.rel (0) target = $region9
    $region8: #{tpu_custom_call.1} parent=1 // pred_region
      _
    $region9: #{tpu_custom_call.1} parent=1 // pred_fallthru
      _
    // Predicated region
    $region10: #{tpu_custom_call.1} parent=1 // pred_check
      _
    $region11: #{tpu_custom_call.1} parent=1 // pred_check_branch
      %27 = sbr.rel (0) target = $region13
    $region12: #{tpu_custom_call.1} parent=1 // pred_region
      %s29 = ssub.s32 256, 256
      %30 = vsyncadd [#allocation3], %s29
      %s31 = sshll.u32 [#allocation2], 4
      %s32 = int_to_ptr.vmem [resolvable:$true] %s31
      %37 = dma.hbm_to_vmem [thread:$0]  %s2, 256, %s32, [#allocation3], 128, 128, 8
    $region13: #{tpu_custom_call.1} parent=1 // pred_fallthru
      _
    // Predicated region
    $region14: #{tpu_custom_call.1} parent=1 // pred_check
      _
    $region15: #{tpu_custom_call.1} parent=1 // pred_check_branch
      %39 = sbr.rel (0) target = $region17
    $region16: #{tpu_custom_call.1} parent=1 // pred_region
      _
    $region17: #{tpu_custom_call.1} parent=1 // pred_fallthru
      _
    // Predicated region
    $region18: #{tpu_custom_call.1} parent=1 // pred_check
      _
    $region19: #{tpu_custom_call.1} parent=1 // pred_check_branch
      %41 = sbr.rel (0) target = $region21
    $region20: #{tpu_custom_call.1} parent=1 // pred_region
      _
    $region21: #{tpu_custom_call.1} parent=1 // pred_fallthru
      _
    // Predicated region
    $region22: #{tpu_custom_call.1} parent=1 // pred_check
      _
    $region23: #{tpu_custom_call.1} parent=1 // pred_check_branch
      %43 = sbr.rel (0) target = $region25
    $region24: #{tpu_custom_call.1} parent=1 // pred_region
      %s45 = ssub.s32 1664, 1664
      %46 = vsyncadd [#allocation6], %s45
      %s47 = sshll.u32 [#allocation5], 4
      %s48 = int_to_ptr.vmem [resolvable:$true] %s47
      %53 = dma.hbm_to_vmem [thread:$0]  %s5, 1664, %s48, [#allocation6], 128, 128, 8
    $region25: #{tpu_custom_call.1} parent=1 // pred_fallthru
      _
    // Predicated region
    $region26: #{tpu_custom_call.1} parent=1 // pred_check
      _
    $region27: #{tpu_custom_call.1} parent=1 // pred_check_branch
      %55 = sbr.rel (0) target = $region29
    $region28: #{tpu_custom_call.1} parent=1 // pred_region
      %s57 = ssub.s32 512, 512
      %58 = vsyncadd [#allocation6], %s57
      %s59 = sshll.u32 [#allocation7], 4
      %s60 = int_to_ptr.vmem [resolvable:$true] %s59
      %65 = dma.hbm_to_vmem [thread:$0]  %s6, 512, %s60, [#allocation6], 128, 128, 8
    $region29: #{tpu_custom_call.1} parent=1 // pred_fallthru
      _
    // Predicated region
    $region30: #{tpu_custom_call.1} parent=1 // pred_check
      _
    $region31: #{tpu_custom_call.1} parent=1 // pred_check_branch
      %67 = sbr.rel (0) target = $region33
    $region32: #{tpu_custom_call.1} parent=1 // pred_region
      _
    $region33: #{tpu_custom_call.1} parent=1 // pred_fallthru
      _
    // Predicated region
    $region34: #{tpu_custom_call.1} parent=1 // pred_check
      _
    $region35: #{tpu_custom_call.1} parent=1 // pred_check_branch
      %69 = sbr.rel (0) target = $region37
    $region36: #{tpu_custom_call.1} parent=1 // pred_region
      %s71 = ssub.s32 512, 512
      %72 = vsyncadd [#allocation9], %s71
      %s73 = sshll.u32 [#allocation8], 4
      %s74 = int_to_ptr.vmem [resolvable:$true] %s73
      %79 = dma.hbm_to_vmem [thread:$0]  %s8, 512, %s74, [#allocation9], 128, 128, 8
    $region37: #{tpu_custom_call.1} parent=1 // pred_fallthru
      _
    // Predicated region
    $region38: #{tpu_custom_call.1} parent=1 // pred_check
      _
    $region39: #{tpu_custom_call.1} parent=1 // pred_check_branch
      %81 = sbr.rel (0) target = $region41
    $region40: #{tpu_custom_call.1} parent=1 // pred_region
      _
    $region41: #{tpu_custom_call.1} parent=1 // pred_fallthru
      _
    // Predicated region
    $region42: #{tpu_custom_call.1} parent=1 // pred_check
      _
    $region43: #{tpu_custom_call.1} parent=1 // pred_check_branch
      %83 = sbr.rel (0) target = $region45
    $region44: #{tpu_custom_call.1} parent=1 // pred_region
      %84 = dma.done [#allocation3], 256
    $region45: #{tpu_custom_call.1} parent=1 // pred_fallthru
      _
    // Predicated region
    $region46: #{tpu_custom_call.1} parent=1 // pred_check
      _
    $region47: #{tpu_custom_call.1} parent=1 // pred_check_branch
      %86 = sbr.rel (0) target = $region49
    $region48: #{tpu_custom_call.1} parent=1 // pred_region
      %87 = dma.done [#allocation6], 1664
    $region49: #{tpu_custom_call.1} parent=1 // pred_fallthru
      _
    // Predicated region
    $region50: #{tpu_custom_call.1} parent=1 // pred_check
      _
    $region51: #{tpu_custom_call.1} parent=1 // pred_check_branch
      %89 = sbr.rel (0) target = $region53
    $region52: #{tpu_custom_call.1} parent=1 // pred_region
      %90 = dma.done [#allocation6], 512
    $region53: #{tpu_custom_call.1} parent=1 // pred_fallthru
      _
    // Predicated region
    $region54: #{tpu_custom_call.1} parent=1 // pred_check
      _
    $region55: #{tpu_custom_call.1} parent=1 // pred_check_branch
      %92 = sbr.rel (0) target = $region57
    $region56: #{tpu_custom_call.1} parent=1 // pred_region
      %93 = dma.done [#allocation9], 512
    $region57: #{tpu_custom_call.1} parent=1 // pred_fallthru
      _
    %v94 = vld [vmem:[%s0] sm:$0xff]
    %v95 = vld [vmem:[%s0 + $0x8] sm:$0xff]
    %v96 = vld [vmem:[%s3] sm:$0x1]
    %98 = vset.pattern.permute.xlu0 0
    %99 = vperm.xlu0 %98, %v94
    %v100 = vpop.permute.xlu0 %99
    %103 = vset.pattern.permute.xlu0 0
    %104 = vperm.xlu0 %103, %v95
    %v105 = vpop.permute.xlu0 %104
    %v108 = vlaneseq
    %v109 = vshrl.u32 %v108, 7
    %v110 = vsub.s32 0, %v109
    %v111 = vrot.slane %v96, %v110
    %v113 = vmul.f32 %v100, %v111
    %v114 = vmul.f32 %v105, %v111
    %v115 = vld [vmem:[%s4] sm:$0x1]
    %v117 = vlaneseq
    %v118 = vshrl.u32 %v117, 7
    %v119 = vsub.s32 0, %v118
    %v120 = vrot.slane %v115, %v119
    %v122 = vadd.f32 %v113, %v120
    %v123 = vadd.f32 %v114, %v120
    %v124 = vand.u32 2147483647, %v122
    %vm125 = vcmp.le.f32.partialorder %v124, 0.7853982
    %vm126 = vcmp.lt.s32.totalorder %v122, 0
    %v127 = vand.u32 %v122, 2139095040
    %v128 = vshrl.u32 %v127, 23
    %v129 = vsub.s32 %v128, 127
    %v130 = vand.u32 2147483647, %v122
    %v131 = vand.u32 %v130, 8388607
    %v132 = vor.u32 %v131, 8388608
    %v133 = vsub.s32 0, %v132
    %v134 = vadd.s32 %v129, 1
    %vm135 = vcmp.gt.s32.totalorder %v134, 0
    %v136 = vsel %vm135, %v134, 0
    %v137 = vshrl.u32 %v136, 5
    %v138 = vand.u32 %v136, 31
    %v139 = vsub.s32 32, %v138
    %v140 = vshrl.u32 683565275, %v139
    %v141 = vshll.u32 683565275, %v138
    %v142 = vshrl.u32 2475754826, %v139
    %v143 = vor.u32 %v141, %v142
    %v144 = vshll.u32 2475754826, %v138
    %v145 = vshrl.u32 2131351028, %v139
    %v146 = vor.u32 %v144, %v145
    %v147 = vshll.u32 2131351028, %v138
    %v148 = vshrl.u32 2102212464, %v139
    %v149 = vor.u32 %v147, %v148
    %v150 = vshll.u32 2102212464, %v138
    %v151 = vshrl.u32 920167782, %v139
    %v152 = vor.u32 %v150, %v151
    %v153 = vshll.u32 920167782, %v138
    %v154 = vshrl.u32 1326507024, %v139
    %v155 = vor.u32 %v153, %v154
    %vm156 = vcmp.lt.s32.totalorder %v137, 1
    %vm157 = vcmp.lt.s32.totalorder %v137, 2
    %vm158 = vcmp.lt.s32.totalorder %v137, 3
    %vm159 = vcmp.lt.s32.totalorder %v137, 4
    %v160 = vsel %vm156, %v140, %v143
    %v161 = vsel %vm159, %v149, 2102212464
    %v162 = vsel %vm158, %v146, %v161
    %v163 = vsel %vm157, %v160, %v162
    %v164 = vsel %vm156, %v143, %v146
    %v165 = vsel %vm159, %v152, 920167782
    %v166 = vsel %vm158, %v149, %v165
    %v167 = vsel %vm157, %v164, %v166
    %v168 = vsel %vm156, %v146, %v149
    %v169 = vsel %vm159, %v155, 1326507024
    %v170 = vsel %vm158, %v152, %v169
    %v171 = vsel %vm157, %v168, %v170
    %v172 = vshll.u32 %v132, 8
    %v173 = vmul.u32.u64.compose %v172, %v171
    %v174 = vextract.low.u32 %v173
    %v175 = vextract.high.u32 %v173
    %v176 = vmul.u32.u64.compose %v172, %v167
    %v177 = vextract.low.u32 %v176
    %v178 = vextract.high.u32 %v176
    %v179 = vmul.u32 %v172, %v163
    %v180 = vadd.s32 %v175, %v177
    %vm181 = vc.u32 %v175, %v177
    %v182 = vadd.s32 %v178, 1
    %v183 = vsel %vm181, %v182, %v178
    %v184 = vadd.s32 %v179, %v183
    %v185 = vadd.s32 %v184, 536870912
    %v186 = vshrl.u32 %v185, 30
    %v187 = vshll.u32 %v186, 30
    %v188 = vsub.s32 %v184, %v187
    %vm189 = vcmp.lt.s32.totalorder %v188, 0
    %v190 = vsub.s32 0, %v188
    %v191 = vsel %vm189, %v190, %v188
    %v192 = vclz %v191
    %v193 = vsub.s32 %v192, 2
    %vm194 = vcmp.gt.s32.totalorder 0, %v193
    %v195 = vsel %vm194, 0, %v193
    %v196 = vsub.s32 32, %v195
    %v197 = vshll.u32 %v188, %v195
    %v198 = vshrl.u32 %v180, %v196
    %v199 = vor.u32 %v197, %v198
    %v200 = vsub.s32 4294967266, %v195
    %v201 = vadd.s32 %v200, 127
    %v202 = vshll.u32 %v201, 23
    %v203 = vor.u32 4788187, %v202
    %v204 = vand.u32 2147483647, %v203
    %v206 = vcvt.s32.f32 %v199
    %v207 = vmul.f32 %v206, %v204
    %v208 = vxor.u32 %v207, 2147483648
    %v209 = vsel %vm126, %v208, %v207
    %v210 = vsub.s32 4, %v186
    %v211 = vsel %vm126, %v210, %v186
    %v212 = vsel %vm125, %v122, %v209
    %v213 = vsel %vm125, 0, %v211
    %v214 = vcosq.f32.pop %v212
    %v215 = vsinq.f32.pop %v212
    %vm216 = vweird.f32 %v122
    %v217 = vand.u32 %v213, 3
    %vm218 = vcmp.lt.s32.totalorder %v217, 2
    %vm219 = vcmp.eq.s32.totalorder %v217, 0
    %v220 = vxor.u32 %v215, 2147483648
    %v221 = vsel %vm219, %v214, %v220
    %vm222 = vcmp.eq.s32.totalorder %v217, 2
    %v223 = vxor.u32 %v214, 2147483648
    %v224 = vsel %vm222, %v223, %v215
    %v225 = vsel %vm218, %v221, %v224
    %v226 = vsel %vm216, nan, %v225
    %v227 = vand.u32 2147483647, %v123
    %vm228 = vcmp.le.f32.partialorder %v227, 0.7853982
    %vm229 = vcmp.lt.s32.totalorder %v123, 0
    %v230 = vand.u32 %v123, 2139095040
    %v231 = vshrl.u32 %v230, 23
    %v232 = vsub.s32 %v231, 127
    %v233 = vand.u32 2147483647, %v123
    %v234 = vand.u32 %v233, 8388607
    %v235 = vor.u32 %v234, 8388608
    %v236 = vsub.s32 0, %v235
    %v237 = vadd.s32 %v232, 1
    %vm238 = vcmp.gt.s32.totalorder %v237, 0
    %v239 = vsel %vm238, %v237, 0
    %v240 = vshrl.u32 %v239, 5
    %v241 = vand.u32 %v239, 31
    %v242 = vsub.s32 32, %v241
    %v243 = vshrl.u32 683565275, %v242
    %v244 = vshll.u32 683565275, %v241
    %v245 = vshrl.u32 2475754826, %v242
    %v246 = vor.u32 %v244, %v245
    %v247 = vshll.u32 2475754826, %v241
    %v248 = vshrl.u32 2131351028, %v242
    %v249 = vor.u32 %v247, %v248
    %v250 = vshll.u32 2131351028, %v241
    %v251 = vshrl.u32 2102212464, %v242
    %v252 = vor.u32 %v250, %v251
    %v253 = vshll.u32 2102212464, %v241
    %v254 = vshrl.u32 920167782, %v242
    %v255 = vor.u32 %v253, %v254
    %v256 = vshll.u32 920167782, %v241
    %v257 = vshrl.u32 1326507024, %v242
    %v258 = vor.u32 %v256, %v257
    %vm259 = vcmp.lt.s32.totalorder %v240, 1
    %vm260 = vcmp.lt.s32.totalorder %v240, 2
    %vm261 = vcmp.lt.s32.totalorder %v240, 3
    %vm262 = vcmp.lt.s32.totalorder %v240, 4
    %v263 = vsel %vm259, %v243, %v246
    %v264 = vsel %vm262, %v252, 2102212464
    %v265 = vsel %vm261, %v249, %v264
    %v266 = vsel %vm260, %v263, %v265
    %v267 = vsel %vm259, %v246, %v249
    %v268 = vsel %vm262, %v255, 920167782
    %v269 = vsel %vm261, %v252, %v268
    %v270 = vsel %vm260, %v267, %v269
    %v271 = vsel %vm259, %v249, %v252
    %v272 = vsel %vm262, %v258, 1326507024
    %v273 = vsel %vm261, %v255, %v272
    %v274 = vsel %vm260, %v271, %v273
    %v275 = vshll.u32 %v235, 8
    %v276 = vmul.u32.u64.compose %v275, %v274
    %v277 = vextract.low.u32 %v276
    %v278 = vextract.high.u32 %v276
    %v279 = vmul.u32.u64.compose %v275, %v270
    %v280 = vextract.low.u32 %v279
    %v281 = vextract.high.u32 %v279
    %v282 = vmul.u32 %v275, %v266
    %v283 = vadd.s32 %v278, %v280
    %vm284 = vc.u32 %v278, %v280
    %v285 = vadd.s32 %v281, 1
    %v286 = vsel %vm284, %v285, %v281
    %v287 = vadd.s32 %v282, %v286
    %v288 = vadd.s32 %v287, 536870912
    %v289 = vshrl.u32 %v288, 30
    %v290 = vshll.u32 %v289, 30
    %v291 = vsub.s32 %v287, %v290
    %vm292 = vcmp.lt.s32.totalorder %v291, 0
    %v293 = vsub.s32 0, %v291
    %v294 = vsel %vm292, %v293, %v291
    %v295 = vclz %v294
    %v296 = vsub.s32 %v295, 2
    %vm297 = vcmp.gt.s32.totalorder 0, %v296
    %v298 = vsel %vm297, 0, %v296
    %v299 = vsub.s32 32, %v298
    %v300 = vshll.u32 %v291, %v298
    %v301 = vshrl.u32 %v283, %v299
    %v302 = vor.u32 %v300, %v301
    %v303 = vsub.s32 4294967266, %v298
    %v304 = vadd.s32 %v303, 127
    %v305 = vshll.u32 %v304, 23
    %v306 = vor.u32 4788187, %v305
    %v307 = vand.u32 2147483647, %v306
    %v309 = vcvt.s32.f32 %v302
    %v310 = vmul.f32 %v309, %v307
    %v311 = vxor.u32 %v310, 2147483648
    %v312 = vsel %vm229, %v311, %v310
    %v313 = vsub.s32 4, %v289
    %v314 = vsel %vm229, %v313, %v289
    %v315 = vsel %vm228, %v123, %v312
    %v316 = vsel %vm228, 0, %v314
    %v317 = vcosq.f32.pop %v315
    %v318 = vsinq.f32.pop %v315
    %vm319 = vweird.f32 %v123
    %v320 = vand.u32 %v316, 3
    %vm321 = vcmp.lt.s32.totalorder %v320, 2
    %vm322 = vcmp.eq.s32.totalorder %v320, 0
    %v323 = vxor.u32 %v318, 2147483648
    %v324 = vsel %vm322, %v317, %v323
    %vm325 = vcmp.eq.s32.totalorder %v320, 2
    %v326 = vxor.u32 %v317, 2147483648
    %v327 = vsel %vm325, %v326, %v318
    %v328 = vsel %vm321, %v324, %v327
    %v329 = vsel %vm319, nan, %v328
    %v330 = vld [vmem:[%s1] sm:$0xff]
    %v331 = vld [vmem:[%s1 + $0x8] sm:$0xff]
    %v332 = vld [vmem:[#allocation5] sm:$0xff]
    %v333 = vld [vmem:[#allocation5 + $0x8] sm:$0xff]
    %v334 = vld [vmem:[#allocation5 + $0x10] sm:$0xff]
    %v335 = vld [vmem:[#allocation5 + $0x18] sm:$0xff]
    %v336 = vld [vmem:[#allocation5 + $0x20] sm:$0xff]
    %v337 = vld [vmem:[#allocation5 + $0x28] sm:$0xff]
    %v338 = vld [vmem:[#allocation5 + $0x30] sm:$0xff]
    %v339 = vld [vmem:[#allocation5 + $0x38] sm:$0xff]
    %v340 = vld [vmem:[#allocation5 + $0x40] sm:$0xff]
    %v341 = vld [vmem:[#allocation5 + $0x48] sm:$0xff]
    %v342 = vld [vmem:[#allocation5 + $0x50] sm:$0xff]
    %v343 = vld [vmem:[#allocation5 + $0x58] sm:$0xff]
    %v344 = vld [vmem:[#allocation5 + $0x60] sm:$0xff]
    %v345 = vld [vmem:[#allocation7] sm:$0xff]
    %v346 = vld [vmem:[#allocation7 + $0x8] sm:$0xff]
    %v347 = vld [vmem:[#allocation7 + $0x10] sm:$0xff]
    %v348 = vld [vmem:[#allocation7 + $0x18] sm:$0xff]
    %vm349 = vcmask 261120
    %v351 = vsel %vm349, %v226, 0
    %v354 = vsel %vm349, %v329, 0
    %356 = vmatprep.subr.mxu0 0.0
    %357 = vmatpush1.msra.mxu0 0.0
    %358 = vmatprep.subr.mxu0 0.0
    %359 = vmatpush1.msra.mxu0 0.0
    %360 = vmatprep.subr.mxu0 0.0
    %361 = vmatpush1.msra.mxu0 0.0
    %362 = vmatprep.subr.mxu0 0.0
    %363 = vmatpush1.msra.mxu0 0.0
    %364 = vmatprep.subr.mxu0 0.0
    %365 = vmatpush1.msra.mxu0 0.0
    %366 = vmatprep.subr.mxu0 0.0
    %367 = vmatpush1.msra.mxu0 0.0
    %368 = vmatprep.subr.mxu0 0.0
    %369 = vmatpush1.msra.mxu0 0.0
    %370 = vmatprep.subr.mxu0 0.0
    %371 = vmatpush1.msra.mxu0 0.0
    %372 = vmatprep.subr.mxu0 0.0
    %373 = vmatpush1.msra.mxu0 0.0
    %374 = vmatprep.subr.mxu0 0.0
    %375 = vmatpush1.msra.mxu0 0.0
    %376 = vmatprep.subr.mxu0 0.0
    %377 = vmatpush1.msra.mxu0 0.0
    %378 = vmatprep.subr.mxu0 0.0
    %379 = vmatpush1.msra.mxu0 0.0
    %380 = vmatprep.subr.mxu0 0.0
    %381 = vmatpush1.msra.mxu0 %v348
    %382 = vmatprep.subr.mxu0 0.0
    %383 = vmatpush1.msra.mxu0 %v347
    %384 = vmatprep.subr.mxu0 0.0
    %385 = vmatpush1.msra.mxu0 %v346
    %386 = vmatprep.subr.mxu0 0.0
    %387 = vmatpush1.msra.mxu0 %v345
    %388 = vmatprep.subr.mxu0 0.0
    %389 = vmatpush2.msra.mxu0 0.0
    %390 = vmatprep.subr.mxu0 0.0
    %391 = vmatpush2.msra.mxu0 0.0
    %392 = vmatprep.subr.mxu0 0.0
    %393 = vmatpush2.msra.mxu0 0.0
    %394 = vmatprep.subr.mxu0 0.0
    %395 = vmatpush2.msra.mxu0 0.0
    %396 = vmatprep.subr.mxu0 0.0
    %397 = vmatpush2.msra.mxu0 0.0
    %398 = vmatprep.subr.mxu0 0.0
    %399 = vmatpush2.msra.mxu0 0.0
    %400 = vmatprep.subr.mxu0 0.0
    %401 = vmatpush2.msra.mxu0 0.0
    %402 = vmatprep.subr.mxu0 0.0
    %403 = vmatpush2.msra.mxu0 0.0
    %404 = vmatprep.subr.mxu0 0.0
    %405 = vmatpush2.msra.mxu0 0.0
    %406 = vmatprep.subr.mxu0 0.0
    %407 = vmatpush2.msra.mxu0 0.0
    %408 = vmatprep.subr.mxu0 0.0
    %409 = vmatpush2.msra.mxu0 0.0
    %410 = vmatprep.subr.mxu0 0.0
    %411 = vmatpush2.msra.mxu0 0.0
    %412 = vmatprep.subr.mxu0 0.0
    %413 = vmatpush2.msra.mxu0 0.0
    %414 = vmatprep.subr.mxu0 0.0
    %415 = vmatpush2.msra.mxu0 0.0
    %416 = vmatprep.subr.mxu0 0.0
    %417 = vmatpush2.msra.mxu0 0.0
    %418 = vmatprep.subr.mxu0 0.0
    %419 = vmatpush2.msra.mxu0 0.0
    %420 = vmatprep.mubr.f32.mxu0 0.0
    %421 = vmatmul.mubr.f32.gmra.mxu0 %v351
    %v422 = vpop.f32.mrf.mxu0
    %v423 = vadd.f32 0.0, %v422
    %v424 = vpop.f32.mrf.mxu0
    %425 = vmatprep.mubr.f32.mxu0 0.0
    %426 = vmatmul.mubr.f32.gmra.mxu0 %v354
    %v427 = vpop.f32.mrf.mxu0
    %v428 = vadd.f32 0.0, %v427
    %v429 = vpop.f32.mrf.mxu0
    %430 = vdwg.mxu0
    %vm431 = vcmask 850944
    %v433 = vsel %vm431, %v330, 0
    %v436 = vsel %vm431, %v331, 0
    %438 = vmatprep.subr.mxu0 0.0
    %439 = vmatpush1.msra.mxu0 0.0
    %440 = vmatprep.subr.mxu0 0.0
    %441 = vmatpush1.msra.mxu0 0.0
    %442 = vmatprep.subr.mxu0 0.0
    %443 = vmatpush1.msra.mxu0 0.0
    %444 = vmatprep.subr.mxu0 0.0
    %445 = vmatpush1.msra.mxu0 %v344
    %446 = vmatprep.subr.mxu0 0.0
    %447 = vmatpush1.msra.mxu0 %v343
    %448 = vmatprep.subr.mxu0 0.0
    %449 = vmatpush1.msra.mxu0 %v342
    %450 = vmatprep.subr.mxu0 0.0
    %451 = vmatpush1.msra.mxu0 %v341
    %452 = vmatprep.subr.mxu0 0.0
    %453 = vmatpush1.msra.mxu0 %v340
    %454 = vmatprep.subr.mxu0 0.0
    %455 = vmatpush1.msra.mxu0 %v339
    %456 = vmatprep.subr.mxu0 0.0
    %457 = vmatpush1.msra.mxu0 %v338
    %458 = vmatprep.subr.mxu0 0.0
    %459 = vmatpush1.msra.mxu0 %v337
    %460 = vmatprep.subr.mxu0 0.0
    %461 = vmatpush1.msra.mxu0 %v336
    %462 = vmatprep.subr.mxu0 0.0
    %463 = vmatpush1.msra.mxu0 %v335
    %464 = vmatprep.subr.mxu0 0.0
    %465 = vmatpush1.msra.mxu0 %v334
    %466 = vmatprep.subr.mxu0 0.0
    %467 = vmatpush1.msra.mxu0 %v333
    %468 = vmatprep.subr.mxu0 0.0
    %469 = vmatpush1.msra.mxu0 %v332
    %470 = vmatprep.subr.mxu0 0.0
    %471 = vmatpush2.msra.mxu0 0.0
    %472 = vmatprep.subr.mxu0 0.0
    %473 = vmatpush2.msra.mxu0 0.0
    %474 = vmatprep.subr.mxu0 0.0
    %475 = vmatpush2.msra.mxu0 0.0
    %476 = vmatprep.subr.mxu0 0.0
    %477 = vmatpush2.msra.mxu0 0.0
    %478 = vmatprep.subr.mxu0 0.0
    %479 = vmatpush2.msra.mxu0 0.0
    %480 = vmatprep.subr.mxu0 0.0
    %481 = vmatpush2.msra.mxu0 0.0
    %482 = vmatprep.subr.mxu0 0.0
    %483 = vmatpush2.msra.mxu0 0.0
    %484 = vmatprep.subr.mxu0 0.0
    %485 = vmatpush2.msra.mxu0 0.0
    %486 = vmatprep.subr.mxu0 0.0
    %487 = vmatpush2.msra.mxu0 0.0
    %488 = vmatprep.subr.mxu0 0.0
    %489 = vmatpush2.msra.mxu0 0.0
    %490 = vmatprep.subr.mxu0 0.0
    %491 = vmatpush2.msra.mxu0 0.0
    %492 = vmatprep.subr.mxu0 0.0
    %493 = vmatpush2.msra.mxu0 0.0
    %494 = vmatprep.subr.mxu0 0.0
    %495 = vmatpush2.msra.mxu0 0.0
    %496 = vmatprep.subr.mxu0 0.0
    %497 = vmatpush2.msra.mxu0 0.0
    %498 = vmatprep.subr.mxu0 0.0
    %499 = vmatpush2.msra.mxu0 0.0
    %500 = vmatprep.subr.mxu0 0.0
    %501 = vmatpush2.msra.mxu0 0.0
    %502 = vmatprep.mubr.f32.mxu0 0.0
    %503 = vmatmul.mubr.f32.gmra.mxu0 %v433
    %v504 = vpop.f32.mrf.mxu0
    %v505 = vadd.f32 %v423, %v504
    %v506 = vpop.f32.mrf.mxu0
    %507 = vmatprep.mubr.f32.mxu0 0.0
    %508 = vmatmul.mubr.f32.gmra.mxu0 %v436
    %v509 = vpop.f32.mrf.mxu0
    %v510 = vadd.f32 %v428, %v509
    %v511 = vpop.f32.mrf.mxu0
    %512 = vdwg.mxu0
    %v513 = vld [vmem:[%s7] sm:$0x1]
    %v515 = vlaneseq
    %v516 = vshrl.u32 %v515, 7
    %v517 = vsub.s32 0, %v516
    %v518 = vrot.slane %v513, %v517
    %v520 = vadd.f32 %v505, %v518
    %v521 = vadd.f32 %v510, %v518
    %v522 = vld [vmem:[#allocation2] sm:$0xff]
    %v523 = vld [vmem:[#allocation2 + $0x8] sm:$0xff]
    %v524 = vld [vmem:[#allocation8] sm:$0xff]
    %v525 = vld [vmem:[#allocation8 + $0x8] sm:$0xff]
    %v526 = vld [vmem:[#allocation8 + $0x10] sm:$0xff]
    %v527 = vld [vmem:[#allocation8 + $0x18] sm:$0xff]
    %v528 = vld [vmem:[%s9] sm:$0x1]
    %v530 = vlaneseq
    %v531 = vshrl.u32 %v530, 7
    %v532 = vsub.s32 0, %v531
    %v533 = vrot.slane %v528, %v532
    %v536 = vsel %vm349, %v522, 0
    %v539 = vsel %vm349, %v523, 0
    %541 = vmatprep.subr.mxu0 0.0
    %542 = vmatpush1.msra.mxu0 0.0
    %543 = vmatprep.subr.mxu0 0.0
    %544 = vmatpush1.msra.mxu0 0.0
    %545 = vmatprep.subr.mxu0 0.0
    %546 = vmatpush1.msra.mxu0 0.0
    %547 = vmatprep.subr.mxu0 0.0
    %548 = vmatpush1.msra.mxu0 0.0
    %549 = vmatprep.subr.mxu0 0.0
    %550 = vmatpush1.msra.mxu0 0.0
    %551 = vmatprep.subr.mxu0 0.0
    %552 = vmatpush1.msra.mxu0 0.0
    %553 = vmatprep.subr.mxu0 0.0
    %554 = vmatpush1.msra.mxu0 0.0
    %555 = vmatprep.subr.mxu0 0.0
    %556 = vmatpush1.msra.mxu0 0.0
    %557 = vmatprep.subr.mxu0 0.0
    %558 = vmatpush1.msra.mxu0 0.0
    %559 = vmatprep.subr.mxu0 0.0
    %560 = vmatpush1.msra.mxu0 0.0
    %561 = vmatprep.subr.mxu0 0.0
    %562 = vmatpush1.msra.mxu0 0.0
    %563 = vmatprep.subr.mxu0 0.0
    %564 = vmatpush1.msra.mxu0 0.0
    %565 = vmatprep.subr.mxu0 0.0
    %566 = vmatpush1.msra.mxu0 %v527
    %567 = vmatprep.subr.mxu0 0.0
    %568 = vmatpush1.msra.mxu0 %v526
    %569 = vmatprep.subr.mxu0 0.0
    %570 = vmatpush1.msra.mxu0 %v525
    %571 = vmatprep.subr.mxu0 0.0
    %572 = vmatpush1.msra.mxu0 %v524
    %573 = vmatprep.subr.mxu0 0.0
    %574 = vmatpush2.msra.mxu0 0.0
    %575 = vmatprep.subr.mxu0 0.0
    %576 = vmatpush2.msra.mxu0 0.0
    %577 = vmatprep.subr.mxu0 0.0
    %578 = vmatpush2.msra.mxu0 0.0
    %579 = vmatprep.subr.mxu0 0.0
    %580 = vmatpush2.msra.mxu0 0.0
    %581 = vmatprep.subr.mxu0 0.0
    %582 = vmatpush2.msra.mxu0 0.0
    %583 = vmatprep.subr.mxu0 0.0
    %584 = vmatpush2.msra.mxu0 0.0
    %585 = vmatprep.subr.mxu0 0.0
    %586 = vmatpush2.msra.mxu0 0.0
    %587 = vmatprep.subr.mxu0 0.0
    %588 = vmatpush2.msra.mxu0 0.0
    %589 = vmatprep.subr.mxu0 0.0
    %590 = vmatpush2.msra.mxu0 0.0
    %591 = vmatprep.subr.mxu0 0.0
    %592 = vmatpush2.msra.mxu0 0.0
    %593 = vmatprep.subr.mxu0 0.0
    %594 = vmatpush2.msra.mxu0 0.0
    %595 = vmatprep.subr.mxu0 0.0
    %596 = vmatpush2.msra.mxu0 0.0
    %597 = vmatprep.subr.mxu0 0.0
    %598 = vmatpush2.msra.mxu0 0.0
    %599 = vmatprep.subr.mxu0 0.0
    %600 = vmatpush2.msra.mxu0 0.0
    %601 = vmatprep.subr.mxu0 0.0
    %602 = vmatpush2.msra.mxu0 0.0
    %603 = vmatprep.subr.mxu0 0.0
    %604 = vmatpush2.msra.mxu0 0.0
    %605 = vmatprep.mubr.f32.mxu0 0.0
    %606 = vmatmul.mubr.f32.gmra.mxu0 %v536
    %v607 = vpop.f32.mrf.mxu0
    %v608 = vadd.f32 %v533, %v607
    %v609 = vpop.f32.mrf.mxu0
    %610 = vmatprep.mubr.f32.mxu0 0.0
    %611 = vmatmul.mubr.f32.gmra.mxu0 %v539
    %v612 = vpop.f32.mrf.mxu0
    %v613 = vadd.f32 %v533, %v612
    %v614 = vpop.f32.mrf.mxu0
    %615 = vdwg.mxu0
    %v616 = vadd.f32 %v520, %v608
    %v617 = vadd.f32 %v521, %v613
    %v618 = vxor.u32 %v616, 2147483648
    %v619 = vxor.u32 %v617, 2147483648
    %v620 = vmul.f32 %v618, 1.442695
    %v621 = vpow.pop %v620
    %v622 = vmul.f32 %v619, 1.442695
    %v623 = vpow.pop %v622
    %v624 = vadd.f32 %v621, 1.0
    %v625 = vadd.f32 %v623, 1.0
    %v626 = vrcp.pop %v624
    %v627 = vmul.f32 1.0, %v626
    %v628 = vrcp.pop %v625
    %v629 = vmul.f32 1.0, %v628
    %632 = vrot.lane.b32.xlu0 %v608, 64
    %v633 = vpop.permute.xlu0 %632
    %634 = vrot.lane.b32.xlu0 %v613, 64
    %v635 = vpop.permute.xlu0 %634
    %v638 = vmul.f32 %v627, %v633
    %v639 = vmul.f32 %v629, %v635
    %642 = vrot.lane.b32.xlu0 %v638, 64
    %v643 = vpop.permute.xlu0 %642
    %644 = vrot.lane.b32.xlu0 %v639, 64
    %v645 = vpop.permute.xlu0 %644
    %v648 = vadd.f32 %v520, %v643
    %v649 = vadd.f32 %v521, %v645
    %v650 = vtanh.pop %v648
    %v651 = vtanh.pop %v649
    %v652 = vsub.f32 1.0, %v627
    %v653 = vsub.f32 1.0, %v629
    %656 = vrot.lane.b32.xlu0 %v650, 96
    %v657 = vpop.permute.xlu0 %656
    %658 = vrot.lane.b32.xlu0 %v651, 96
    %v659 = vpop.permute.xlu0 %658
    %v662 = vmul.f32 %v652, %v657
    %v663 = vmul.f32 %v653, %v659
    %664 = vrot.lane.b32.xlu0 %v522, 32
    %v665 = vpop.permute.xlu0 %664
    %666 = vrot.lane.b32.xlu0 %v523, 32
    %v667 = vpop.permute.xlu0 %666
    %v670 = vmul.f32 %v627, %v665
    %v671 = vmul.f32 %v629, %v667
    %v672 = vadd.f32 %v662, %v670
    %v673 = vadd.f32 %v663, %v671
    %676 = vrot.lane.b32.xlu0 %v672, 96
    %v677 = vpop.permute.xlu0 %676
    %678 = vrot.lane.b32.xlu0 %v673, 96
    %v679 = vpop.permute.xlu0 %678
    %682 = vst.msk [vmem:[#allocation10] sm:$0xff] %vm349, %v677
    %683 = vst.msk [vmem:[#allocation10 + $0x8] sm:$0xff] %vm349, %v679
    %686 = vrot.lane.b32.xlu0 %v520, 64
    %v687 = vpop.permute.xlu0 %686
    %688 = vrot.lane.b32.xlu0 %v521, 64
    %v689 = vpop.permute.xlu0 %688
    %v692 = vadd.f32 %v672, %v687
    %v693 = vadd.f32 %v673, %v689
    %696 = vrot.lane.b32.xlu0 %v692, 96
    %v697 = vpop.permute.xlu0 %696
    %698 = vrot.lane.b32.xlu0 %v693, 96
    %v699 = vpop.permute.xlu0 %698
    %702 = vst.msk [vmem:[#allocation11] sm:$0xff] %vm349, %v697
    %703 = vst.msk [vmem:[#allocation11 + $0x8] sm:$0xff] %vm349, %v699
    // Predicated region
    $region58: #{tpu_custom_call.1} parent=1 // pred_check
      _
    $region59: #{tpu_custom_call.1} parent=1 // pred_check_branch
      %705 = sbr.rel (0) target = $region61
    $region60: #{tpu_custom_call.1} parent=1 // pred_region
      %s707 = ssub.s32 256, 256
      %708 = vsyncadd [#allocation4], %s707
      %s709 = sshll.u32 [#allocation10], 4
      %s710 = int_to_ptr.vmem [resolvable:$true] %s709
      %715 = dma.vmem_to_hbm [thread:$0]  %s710, 256, %s10, [#allocation4], 128, 128, 8
    $region61: #{tpu_custom_call.1} parent=1 // pred_fallthru
      _
    // Predicated region
    $region62: #{tpu_custom_call.1} parent=1 // pred_check
      _
    $region63: #{tpu_custom_call.1} parent=1 // pred_check_branch
      %717 = sbr.rel (0) target = $region65
    $region64: #{tpu_custom_call.1} parent=1 // pred_region
      %s719 = ssub.s32 256, 256
      %720 = vsyncadd [#allocation12], %s719
      %s721 = sshll.u32 [#allocation11], 4
      %s722 = int_to_ptr.vmem [resolvable:$true] %s721
      %727 = dma.vmem_to_hbm [thread:$0]  %s722, 256, %s11, [#allocation12], 128, 128, 8
    $region65: #{tpu_custom_call.1} parent=1 // pred_fallthru
      _
    // Predicated region
    $region66: #{tpu_custom_call.1} parent=1 // pred_check
      _
    $region67: #{tpu_custom_call.1} parent=1 // pred_check_branch
      %729 = sbr.rel (0) target = $region69
    $region68: #{tpu_custom_call.1} parent=1 // pred_region
      %730 = dma.done [#allocation4], 256
    $region69: #{tpu_custom_call.1} parent=1 // pred_fallthru
      _
    // Predicated region
    $region70: #{tpu_custom_call.1} parent=1 // pred_check
      _
    $region71: #{tpu_custom_call.1} parent=1 // pred_check_branch
      %732 = sbr.rel (0) target = $region73
    $region72: #{tpu_custom_call.1} parent=1 // pred_region
      %733 = dma.done [#allocation12], 256
    $region73: #{tpu_custom_call.1} parent=1 // pred_fallthru
      _
    %734 = vsyncpa [#allocation3], 1
    %735 = vsyncpa [#allocation6], 1
    %736 = vsyncpa [#allocation9], 1
    %737 = vsyncpa [#allocation4], 1
    %738 = vsyncpa [#allocation12], 1

</llo_original>
